<compile_context>
chip_gen: v5e
topology: v5e:2x2
jax: 0.10.0
libtpu: 0.0.40
codegen_flags: <defaults>
</compile_context>

<pallas_src>
import jax
import jax.numpy as jnp
from jax.experimental import pallas as pl
from jax.experimental.pallas import tpu as pltpu


def _choose_victim_kernel(hv_ref, w_ref, b_ref, u_ref, scal_ref, hv_keep_ref):
    N, H = hv_ref.shape

    hv = hv_ref[...]                       # [N, H] f32
    w_row = w_ref[...]                     # [1, H] f32 (choose_death.weight)
    b = b_ref[...]                         # [1, 1] f32
    u = u_ref[...]                         # [1, 1] f32 in [0, 1)

    # --- death head on the VPU: logits[n] = <hv[n, :], w> + b ----------------
    logits = jnp.sum(hv * w_row, axis=-1, keepdims=True) + b          # [N, 1]

    # --- stable softmax pieces (denominator folded into the threshold) -------
    m = jnp.max(logits, axis=0, keepdims=True)                         # [1, 1]
    ex = jnp.exp(logits - m)                                           # [N, 1]
    denom = jnp.sum(ex, axis=0, keepdims=True)                         # [1, 1]

    # --- inclusive prefix sum of ex, node axis in lanes ----------------------
    # cdf_row[0, j] = sum_{i <= j} ex[i]; at N <= 8 this is one vreg of VPU work
    # plus one sublane reduce (no MXU round trip, no divide).
    # TODO(synk): for large N switch to a log2(N) pltpu.roll shift-and-add scan.
    i_ids = jax.lax.broadcasted_iota(jnp.int32, (N, N), 0)
    j_ids = jax.lax.broadcasted_iota(jnp.int32, (N, N), 1)
    contrib = jnp.where(i_ids <= j_ids, ex, 0.0)                       # [N, N]
    cdf_row = jnp.sum(contrib, axis=0, keepdims=True)                  # [1, N]

    # --- Categorical sample via inverse CDF: count(cdf <= u * denom) ---------
    thresh = u * denom                                                 # [1, 1]
    victim = jnp.sum((cdf_row <= thresh).astype(jnp.int32), keepdims=True)
    victim = jnp.minimum(victim, N - 1)                                # [1, 1] i32

    # --- log_prob(victim) = logits[victim] - m - log(denom) ------------------
    node_ids = jax.lax.broadcasted_iota(jnp.int32, (N, 1), 0)
    v_logit = jnp.sum(jnp.where(node_ids == victim, logits, 0.0), keepdims=True)
    logp = v_logit - m - jnp.log(denom)                                # [1, 1]

    # --- pack both scalar results into one (1, 2) tile (single writeback) ----
    lane = jax.lax.broadcasted_iota(jnp.int32, (1, 2), 1)
    scal_ref[...] = jnp.where(lane == 0, victim.astype(jnp.float32), logp)

    # --- g.remove_nodes([victim]): VPU blend of two shifted views ------------
    # out[i] = hv[i] if i < victim else hv[i + 1]
    keep_ids = jax.lax.broadcasted_iota(jnp.int32, (N - 1, 1), 0)
    hv_keep_ref[...] = jnp.where(keep_ids < victim, hv[: N - 1, :], hv[1:, :])


def choose_victim_batched(hv, w, b, u):
    """Batched ChooseVictimAgent forward.

    hv: [G, N, H] node embeddings per graph
    w:  [1, H]    choose_death.weight
    b:  [1]       choose_death.bias
    u:  [G]       uniform samples driving the per-graph Categorical draw

    Returns (victims[G] int32, victim_log_probs[G] f32, hv_after[G, N-1, H] f32).
    """
    G, N, H = hv.shape
    if N < 2:
        raise ValueError("ChooseVictimAgent needs at least 2 nodes to delete one.")

    w_row = jnp.asarray(w, jnp.float32).reshape(1, H)
    b2 = jnp.asarray(b, jnp.float32).reshape(1, 1)
    u3 = jnp.asarray(u, jnp.float32).reshape(G, 1, 1)

    scal, hv_keep = pl.pallas_call(
        _choose_victim_kernel,
        grid=(G,),
        in_specs=[
            pl.BlockSpec((None, N, H), lambda g: (g, 0, 0)),       # hv   (per graph)
            pl.BlockSpec((1, H), lambda g: (0, 0)),                # w    (shared)
            pl.BlockSpec((1, 1), lambda g: (0, 0)),                # b    (shared)
            pl.BlockSpec((None, 1, 1), lambda g: (g, 0, 0)),       # u    (per graph)
        ],
        out_specs=(
            pl.BlockSpec((None, 1, 2), lambda g: (g, 0, 0)),       # packed scalars
            pl.BlockSpec((None, N - 1, H), lambda g: (g, 0, 0)),   # surviving rows
        ),
        out_shape=(
            jax.ShapeDtypeStruct((G, 1, 2), jnp.float32),
            jax.ShapeDtypeStruct((G, N - 1, H), jnp.float32),
        ),
        compiler_params=pltpu.CompilerParams(dimension_semantics=("parallel",)),
    )(hv.astype(jnp.float32), w_row, b2, u3)

    victims = scal[:, 0, 0].astype(jnp.int32)
    logps = scal[:, 0, 1]
    return victims, logps, hv_keep


def choose_victim(hv, w, b, u):
    """Single-graph forward matching ChooseVictimAgent.forward."""
    v, lp, hk = choose_victim_batched(hv[None], w, b, jnp.reshape(u, (1,)))
    return v[0], lp[0], hk[0]


def choose_victim_ref(hv, w, b, u):
    """Pure-JAX reference (mirrors the PyTorch forward with the same uniform u)."""
    N = hv.shape[0]
    logits = (hv @ jnp.reshape(w, (-1, 1)) + jnp.reshape(b, (1, 1)))[:, 0]   # [N]
    probs = jax.nn.softmax(logits, axis=0)
    cdf = jnp.cumsum(probs)
    victim = jnp.minimum(jnp.sum((cdf <= u).astype(jnp.int32)), N - 1)
    logp = jax.nn.log_softmax(logits, axis=0)[victim]
    rows = jnp.arange(N - 1)
    keep_idx = rows + (rows >= victim).astype(jnp.int32)
    return victim, logp, hv[keep_idx]


if __name__ == "__main__":
    G, N, H = 2, 8, 32      # 2 graphs, 8 nodes each, node_hidden_size = 32

    key = jax.random.PRNGKey(0)
    k_hv, k_w, k_b, k_u = jax.random.split(key, 4)

    hv = jax.random.normal(k_hv, (G, N, H), jnp.float32)               # g.ndata['hv'] per graph
    bound = 1.0 / (H ** 0.5)                                           # nn.Linear default init range
    w = jax.random.uniform(k_w, (1, H), jnp.float32, -bound, bound)    # choose_death.weight
    b = jax.random.uniform(k_b, (1,), jnp.float32, -bound, bound)      # choose_death.bias
    u = jax.random.uniform(k_u, (G,), jnp.float32)                     # uniforms for sampling
    # TODO(synk): torch.distributions.Categorical RNG cannot be matched bit-for-bit;
    # sampling semantics are reproduced via inverse-CDF on these jax.random uniforms.

    victims, logps, hv_after = choose_victim_batched(hv, w, b, u)
    jax.block_until_ready((victims, logps, hv_after))

    assert hv_after.shape == (G, N - 1, H)
    for g in range(G):
        v_r, lp_r, hk_r = choose_victim_ref(hv[g], w, b, u[g])
        assert int(victims[g]) == int(v_r), (g, int(victims[g]), int(v_r))
        assert jnp.allclose(logps[g], lp_r, atol=1e-5, rtol=1e-5)
        assert jnp.allclose(hv_after[g], hk_r, atol=1e-6, rtol=1e-6)

    print("KERNEL_OK")
</pallas_src>

<mosaic_0001>
module attributes {stable_mosaic.version = 11 : i64} {
  func.func @_choose_victim_kernel(%arg0: i32, %arg1: memref<1x8x32xf32, #tpu.memory_space<vmem>>, %arg2: memref<1x32xf32, #tpu.memory_space<vmem>>, %arg3: memref<1x1xf32, #tpu.memory_space<vmem>>, %arg4: memref<1x1x1xf32, #tpu.memory_space<vmem>>, %arg5: memref<1x1x2xf32, #tpu.memory_space<vmem>>, %arg6: memref<1x7x32xf32, #tpu.memory_space<vmem>>) attributes {dimension_semantics = [#tpu.dimension_semantics<parallel>], iteration_bounds = array<i64: 2>, scalar_prefetch = 0 : i64, scratch_operands = 0 : i64, tpu.core_type = #tpu.core_type<tc>, window_params = [{transform_indices = @transform_0, window_bounds = array<i64: 1, 8, 32>}, {pipeline_mode = #tpu.pipeline_mode<synchronous>, transform_indices = @transform_1, window_bounds = array<i64: 1, 32>}, {pipeline_mode = #tpu.pipeline_mode<synchronous>, transform_indices = @transform_2, window_bounds = array<i64: 1, 1>}, {transform_indices = @transform_3, window_bounds = array<i64: 1, 1, 1>}, {transform_indices = @transform_4, window_bounds = array<i64: 1, 1, 2>}, {transform_indices = @transform_5, window_bounds = array<i64: 1, 7, 32>}]} {
    %c0 = arith.constant 0 : index
    %c0_0 = arith.constant 0 : index
    %c0_1 = arith.constant 0 : index
    %0 = vector.load %arg1[%c0, %c0_0, %c0_1] : memref<1x8x32xf32, #tpu.memory_space<vmem>>, vector<1x8x32xf32>
    %1 = vector.shape_cast %0 : vector<1x8x32xf32> to vector<8x32xf32>
    %c0_2 = arith.constant 0 : index
    %c0_3 = arith.constant 0 : index
    %2 = vector.load %arg2[%c0_2, %c0_3] : memref<1x32xf32, #tpu.memory_space<vmem>>, vector<1x32xf32>
    %c0_4 = arith.constant 0 : index
    %c0_5 = arith.constant 0 : index
    %3 = vector.load %arg3[%c0_4, %c0_5] : memref<1x1xf32, #tpu.memory_space<vmem>>, vector<1x1xf32>
    %c0_6 = arith.constant 0 : index
    %c0_7 = arith.constant 0 : index
    %c0_8 = arith.constant 0 : index
    %4 = vector.load %arg4[%c0_6, %c0_7, %c0_8] : memref<1x1x1xf32, #tpu.memory_space<vmem>>, vector<1x1x1xf32>
    %5 = vector.shape_cast %4 : vector<1x1x1xf32> to vector<1x1xf32>
    %6 = vector.broadcast %2 : vector<1x32xf32> to vector<8x32xf32>
    %7 = arith.mulf %1, %6 : vector<8x32xf32>
    %cst = arith.constant dense<0.000000e+00> : vector<8xf32>
    %8 = vector.multi_reduction <add>, %7, %cst [1] : vector<8x32xf32> to vector<8xf32>
    %9 = vector.shape_cast %8 : vector<8xf32> to vector<8x1xf32>
    %10 = vector.broadcast %3 : vector<1x1xf32> to vector<8x1xf32>
    %11 = arith.addf %9, %10 : vector<8x1xf32>
    %cst_9 = arith.constant dense<0xFF800000> : vector<1xf32>
    %12 = vector.multi_reduction <maximumf>, %11, %cst_9 [0] : vector<8x1xf32> to vector<1xf32>
    %13 = vector.shape_cast %12 : vector<1xf32> to vector<1x1xf32>
    %14 = vector.broadcast %13 : vector<1x1xf32> to vector<8x1xf32>
    %15 = arith.subf %11, %14 : vector<8x1xf32>
    %16 = math.exp %15 : vector<8x1xf32>
    %cst_10 = arith.constant dense<0.000000e+00> : vector<1xf32>
    %17 = vector.multi_reduction <add>, %16, %cst_10 [0] : vector<8x1xf32> to vector<1xf32>
    %18 = vector.shape_cast %17 : vector<1xf32> to vector<1x1xf32>
    %19 = tpu.iota {dimensions = array<i32: 0>} : vector<8x8xi32>
    %20 = tpu.iota {dimensions = array<i32: 1>} : vector<8x8xi32>
    %21 = arith.cmpi sle, %19, %20 : vector<8x8xi32>
    %cst_11 = arith.constant 0.000000e+00 : f32
    %22 = vector.shape_cast %16 : vector<8x1xf32> to vector<8x1xf32>
    %23 = vector.broadcast %22 : vector<8x1xf32> to vector<8x8xf32>
    %24 = vector.broadcast %cst_11 : f32 to vector<8x8xf32>
    %25 = arith.select %21, %23, %24 : vector<8x8xi1>, vector<8x8xf32>
    %cst_12 = arith.constant dense<0.000000e+00> : vector<8xf32>
    %26 = vector.multi_reduction <add>, %25, %cst_12 [0] : vector<8x8xf32> to vector<8xf32>
    %27 = vector.shape_cast %26 : vector<8xf32> to vector<1x8xf32>
    %28 = arith.mulf %5, %18 : vector<1x1xf32>
    %29 = vector.broadcast %28 : vector<1x1xf32> to vector<1x8xf32>
    %30 = arith.cmpf ole, %27, %29 : vector<1x8xf32>
    %31 = arith.extui %30 : vector<1x8xi1> to vector<1x8xi32>
    %32 = vector.shape_cast %31 : vector<1x8xi32> to vector<1x1x8xi32>
    %cst_13 = arith.constant dense<0> : vector<1xi32>
    %33 = vector.multi_reduction <add>, %32, %cst_13 [1, 2] : vector<1x1x8xi32> to vector<1xi32>
    %34 = vector.shape_cast %33 : vector<1xi32> to vector<1x1x1xi32>
    %35 = vector.extract %34[0, 0, 0] : i32 from vector<1x1x1xi32>
    %36 = vector.broadcast %35 : i32 to vector<1x1xi32>
    %c7_i32 = arith.constant 7 : i32
    %37 = vector.broadcast %c7_i32 : i32 to vector<1x1xi32>
    %38 = arith.minsi %36, %37 : vector<1x1xi32>
    %39 = tpu.iota {dimensions = array<i32: 0>} : vector<8x1xi32>
    %40 = vector.broadcast %38 : vector<1x1xi32> to vector<8x1xi32>
    %41 = arith.cmpi eq, %39, %40 : vector<8x1xi32>
    %cst_14 = arith.constant 0.000000e+00 : f32
    %42 = vector.broadcast %cst_14 : f32 to vector<8x1xf32>
    %43 = arith.select %41, %11, %42 : vector<8x1xi1>, vector<8x1xf32>
    %44 = vector.shape_cast %43 : vector<8x1xf32> to vector<1x8x1xf32>
    %cst_15 = arith.constant dense<0.000000e+00> : vector<1xf32>
    %45 = vector.multi_reduction <add>, %44, %cst_15 [1, 2] : vector<1x8x1xf32> to vector<1xf32>
    %46 = vector.shape_cast %45 : vector<1xf32> to vector<1x1x1xf32>
    %47 = vector.extract %46[0, 0, 0] : f32 from vector<1x1x1xf32>
    %48 = vector.broadcast %47 : f32 to vector<1x1xf32>
    %49 = arith.subf %48, %13 : vector<1x1xf32>
    %50 = math.log %18 : vector<1x1xf32>
    %51 = arith.subf %49, %50 : vector<1x1xf32>
    %52 = tpu.iota {dimensions = array<i32: 1>} : vector<1x2xi32>
    %c0_i32 = arith.constant 0 : i32
    %53 = vector.broadcast %c0_i32 : i32 to vector<1x2xi32>
    %54 = arith.cmpi eq, %52, %53 : vector<1x2xi32>
    %55 = arith.sitofp %38 : vector<1x1xi32> to vector<1x1xf32>
    %56 = vector.shape_cast %55 : vector<1x1xf32> to vector<1x1xf32>
    %57 = vector.broadcast %56 : vector<1x1xf32> to vector<1x2xf32>
    %58 = vector.shape_cast %51 : vector<1x1xf32> to vector<1x1xf32>
    %59 = vector.broadcast %58 : vector<1x1xf32> to vector<1x2xf32>
    %60 = arith.select %54, %57, %59 : vector<1x2xi1>, vector<1x2xf32>
    %c0_16 = arith.constant 0 : index
    %c0_17 = arith.constant 0 : index
    %c0_18 = arith.constant 0 : index
    %61 = vector.load %arg5[%c0_16, %c0_17, %c0_18] : memref<1x1x2xf32, #tpu.memory_space<vmem>>, vector<1x1x2xf32>
    %62 = vector.shape_cast %61 : vector<1x1x2xf32> to vector<1x2xf32>
    %63 = vector.shape_cast %60 : vector<1x2xf32> to vector<1x1x2xf32>
    tpu.vector_store %arg5[%c0_16, %c0_17, %c0_18], %63 {strides = array<i32>} : memref<1x1x2xf32, #tpu.memory_space<vmem>>, vector<1x1x2xf32>,
    %64 = tpu.iota {dimensions = array<i32: 0>} : vector<7x1xi32>
    %65 = vector.broadcast %38 : vector<1x1xi32> to vector<7x1xi32>
    %66 = arith.cmpi slt, %64, %65 : vector<7x1xi32>
    %67 = vector.extract_strided_slice %1 {offsets = [0, 0], sizes = [7, 32], strides = [1, 1]} : vector<8x32xf32> to vector<7x32xf32>
    %68 = vector.extract_strided_slice %1 {offsets = [1, 0], sizes = [7, 32], strides = [1, 1]} : vector<8x32xf32> to vector<7x32xf32>
    %69 = vector.shape_cast %66 : vector<7x1xi1> to vector<7x1xi1>
    %70 = vector.broadcast %69 : vector<7x1xi1> to vector<7x32xi1>
    %71 = arith.select %70, %67, %68 : vector<7x32xi1>, vector<7x32xf32>
    %c0_19 = arith.constant 0 : index
    %c0_20 = arith.constant 0 : index
    %c0_21 = arith.constant 0 : index
    %72 = vector.load %arg6[%c0_19, %c0_20, %c0_21] : memref<1x7x32xf32, #tpu.memory_space<vmem>>, vector<1x7x32xf32>
    %73 = vector.shape_cast %72 : vector<1x7x32xf32> to vector<7x32xf32>
    %74 = vector.shape_cast %71 : vector<7x32xf32> to vector<1x7x32xf32>
    tpu.vector_store %arg6[%c0_19, %c0_20, %c0_21], %74 {strides = array<i32>} : memref<1x7x32xf32, #tpu.memory_space<vmem>>, vector<1x7x32xf32>,
    return
  }
  func.func @transform_0(%arg0: i32) -> (i32, i32, i32) {
    %c0_i32 = arith.constant 0 : i32
    %c0_i32_0 = arith.constant 0 : i32
    %c0_i32_1 = arith.constant 0 : i32
    return %arg0, %c0_i32, %c0_i32_0 : i32, i32, i32
  }
  func.func @transform_1(%arg0: i32) -> (i32, i32) {
    %c0_i32 = arith.constant 0 : i32
    %c0_i32_0 = arith.constant 0 : i32
    %c0_i32_1 = arith.constant 0 : i32
    return %c0_i32, %c0_i32_0 : i32, i32
  }
  func.func @transform_2(%arg0: i32) -> (i32, i32) {
    %c0_i32 = arith.constant 0 : i32
    %c0_i32_0 = arith.constant 0 : i32
    %c0_i32_1 = arith.constant 0 : i32
    return %c0_i32, %c0_i32_0 : i32, i32
  }
  func.func @transform_3(%arg0: i32) -> (i32, i32, i32) {
    %c0_i32 = arith.constant 0 : i32
    %c0_i32_0 = arith.constant 0 : i32
    %c0_i32_1 = arith.constant 0 : i32
    return %arg0, %c0_i32, %c0_i32_0 : i32, i32, i32
  }
  func.func @transform_4(%arg0: i32) -> (i32, i32, i32) {
    %c0_i32 = arith.constant 0 : i32
    %c0_i32_0 = arith.constant 0 : i32
    %c0_i32_1 = arith.constant 0 : i32
    return %arg0, %c0_i32, %c0_i32_0 : i32, i32, i32
  }
  func.func @transform_5(%arg0: i32) -> (i32, i32, i32) {
    %c0_i32 = arith.constant 0 : i32
    %c0_i32_0 = arith.constant 0 : i32
    %c0_i32_1 = arith.constant 0 : i32
    return %arg0, %c0_i32, %c0_i32_0 : i32, i32, i32
  }
}

</mosaic_0001>

<llo_original>
// kernel: tpu_custom_call.1
$region0: #{tpu_custom_call.1}
  #allocation0 [shape = 'u32[]', space=smem, size = 0x4, offset = 0x4, fixed_abs, tag = 'smem constant byte address 0x4 - core index']
  #allocation1 [shape = 'u32[72,128]{1,0:T(1,128)}', space=vmem, size = 0x9000, scoped, tag = 'internal scratch']
  #allocation2 [shape = 'f32[1,1]{1,0:T(1,128)S(1)}', space=vmem, size = 0x200, scoped, tag = 'scoped memory for tpu_custom_call.1']
  %s0 = inlined_call_operand.hbm [shape: f32[2,8,32], index: 0, kind: input, shape index: {}]
  %s1 = inlined_call_operand.vmem [shape: f32[1,32], index: 1, kind: input, shape index: {}]
  %s2 = inlined_call_operand.<no memory space> [shape: f32[1,1], index: 2, kind: input, shape index: {}]
  %s3 = inlined_call_operand.vmem [shape: f32[2,1,1], index: 3, kind: input, shape index: {}]
  %s4 = inlined_call_operand.hbm [shape: f32[2,1,2], index: 4, kind: output, shape index: {0}]
  %s5 = inlined_call_operand.vmem [shape: f32[2,7,32], index: 5, kind: output, shape index: {1}]
  %6 = xla_tuple %s4, %s5
  %s7 = sld [smem:[#allocation0]]
  $region61: #{tpu_custom_call.1} parent=0
    _
  %s9 = ssub.s32 1, %s7
  %s10 = scalar_select 0, %s9, %s7
  %v11 = vstv %s2
  %12 = vst [vmem:[#allocation2] sm:$0x1] %v11
  $region1: #{tpu_custom_call.1} parent=0
    #allocation3 [shape = 'u8[8192]{0}', space=vmem, size = 0x2000, scoped, tag = 'input window, operand 0']
    #allocation4 [shape = 's32[2]{0}', space=sflag, size = 0x8, scoped, tag = 'scoped memory for tpu_custom_call.1']
    #allocation5 [shape = 's32[2]{0}', space=sflag, size = 0x8, scoped, tag = 'scoped memory for tpu_custom_call.1']
    #allocation6 [shape = 'u8[1024]{0}', space=vmem, size = 0x400, scoped, tag = 'output window, operand 0']
    %13 = vsyncpa [#allocation4], 0
    %s14 = scalar_lea.sflag [#allocation4], 1
    %15 = vsyncpa %s14, 0
    %16 = vsyncpa [#allocation5], 0
    %s17 = scalar_lea.sflag [#allocation5], 1
    %18 = vsyncpa %s17, 0
    loop: start=0, step=1, limit=4
    $region2: #{tpu_custom_call.1} parent=1 // loop_pre_header
      _
    $region3: #{tpu_custom_call.1} parent=1 // loop_header
      %s20 = sphi 0, %s24
      %p21 = scmp.ge.s32.totalorder %s20, 4
      %s30 = sphi 0, %s32
      %s33 = sphi 0, %s30
      %s34 = sphi 0, %s33
      %s50 = sphi 0, %s34
      %s54 = sphi 0, %s54
      %s56 = sphi 0, %s54
      %s57 = sphi 0, %s56
      %s71 = sphi 0, %s57
      %s75 = sphi 0, %s75
      %s77 = sphi 0, %s75
      %s78 = sphi 0, %s77
      %s92 = sphi 0, %s78
      %s98 = sphi 0, %s100
      %s101 = sphi 0, %s98
      %s102 = sphi 0, %s101
      %s118 = sphi 0, %s102
      %s124 = sphi 0, %s126
      %s127 = sphi 0, %s124
      %s128 = sphi 0, %s127
      %s144 = sphi 0, %s128
      %s150 = sphi 0, %s152
      %s153 = sphi 0, %s150
      %s154 = sphi 0, %s153
      %s170 = sphi 0, %s154
    $region4: #{tpu_custom_call.1} parent=1 // loop_header_branch
      %23 = sbr.rel (%p21) target = $region8
    $region5: #{tpu_custom_call.1} parent=1 // loop_body
      %s25 = ssub.s32 %s20, 1
      %s26 = ssub.s32 %s20, 2
      %s27 = sadd.s32 %s20, 1
      %s28 = ssub.s32 %s20, %s27
      %p29 = scmp.eq.s32.totalorder %s28, 0
      %s31 = sadd.s32 %s30, 1
      %s32 = scalar_select %p29, %s30, %s31
      %p35 = pneg %p29
      %p36 = scmp.eq.s32.totalorder %s20, 1
      %p37 = por %p35, %p36
      %p38 = scmp.ne.s32.totalorder %s30, %s33
      %p39 = scmp.eq.s32.totalorder %s20, 0
      %p40 = por %p38, %p39
      %p41 = scmp.ne.s32.totalorder %s30, %s33
      %p42 = scmp.eq.s32.totalorder %s25, 1
      %p43 = por %p41, %p42
      %p44 = scmp.ne.s32.totalorder %s33, %s34
      %p45 = scmp.eq.s32.totalorder %s25, 0
      %p46 = por %p44, %p45
      %p47 = scmp.ne.s32.totalorder %s33, %s34
      %p48 = scmp.eq.s32.totalorder %s26, 1
      %p49 = por %p47, %p48
      %p51 = scmp.ne.s32.totalorder %s34, %s50
      %p52 = scmp.eq.s32.totalorder %s26, 0
      %p53 = por %p51, %p52
      %s55 = sadd.s32 %s54, 1
      %p58 = scmp.eq.s32.totalorder %s20, 1
      %p59 = scmp.ne.s32.totalorder %s54, %s56
      %p60 = scmp.eq.s32.totalorder %s20, 0
      %p61 = por %p59, %p60
      %p62 = scmp.ne.s32.totalorder %s54, %s56
      %p63 = scmp.eq.s32.totalorder %s25, 1
      %p64 = por %p62, %p63
      %p65 = scmp.ne.s32.totalorder %s56, %s57
      %p66 = scmp.eq.s32.totalorder %s25, 0
      %p67 = por %p65, %p66
      %p68 = scmp.ne.s32.totalorder %s56, %s57
      %p69 = scmp.eq.s32.totalorder %s26, 1
      %p70 = por %p68, %p69
      %p72 = scmp.ne.s32.totalorder %s57, %s71
      %p73 = scmp.eq.s32.totalorder %s26, 0
      %p74 = por %p72, %p73
      %s76 = sadd.s32 %s75, 1
      %p79 = scmp.eq.s32.totalorder %s20, 1
      %p80 = scmp.ne.s32.totalorder %s75, %s77
      %p81 = scmp.eq.s32.totalorder %s20, 0
      %p82 = por %p80, %p81
      %p83 = scmp.ne.s32.totalorder %s75, %s77
      %p84 = scmp.eq.s32.totalorder %s25, 1
      %p85 = por %p83, %p84
      %p86 = scmp.ne.s32.totalorder %s77, %s78
      %p87 = scmp.eq.s32.totalorder %s25, 0
      %p88 = por %p86, %p87
      %p89 = scmp.ne.s32.totalorder %s77, %s78
      %p90 = scmp.eq.s32.totalorder %s26, 1
      %p91 = por %p89, %p90
      %p93 = scmp.ne.s32.totalorder %s78, %s92
      %p94 = scmp.eq.s32.totalorder %s26, 0
      %p95 = por %p93, %p94
      %s96 = ssub.s32 %s20, %s27
      %p97 = scmp.eq.s32.totalorder %s96, 0
      %s99 = sadd.s32 %s98, 1
      %s100 = scalar_select %p97, %s98, %s99
      %p103 = pneg %p97
      %p104 = scmp.eq.s32.totalorder %s20, 1
      %p105 = por %p103, %p104
      %p106 = scmp.ne.s32.totalorder %s98, %s101
      %p107 = scmp.eq.s32.totalorder %s20, 0
      %p108 = por %p106, %p107
      %p109 = scmp.ne.s32.totalorder %s98, %s101
      %p110 = scmp.eq.s32.totalorder %s25, 1
      %p111 = por %p109, %p110
      %p112 = scmp.ne.s32.totalorder %s101, %s102
      %p113 = scmp.eq.s32.totalorder %s25, 0
      %p114 = por %p112, %p113
      %p115 = scmp.ne.s32.totalorder %s101, %s102
      %p116 = scmp.eq.s32.totalorder %s26, 1
      %p117 = por %p115, %p116
      %p119 = scmp.ne.s32.totalorder %s102, %s118
      %p120 = scmp.eq.s32.totalorder %s26, 0
      %p121 = por %p119, %p120
      %s122 = ssub.s32 %s20, %s27
      %p123 = scmp.eq.s32.totalorder %s122, 0
      %s125 = sadd.s32 %s124, 1
      %s126 = scalar_select %p123, %s124, %s125
      %p129 = pneg %p123
      %p130 = scmp.eq.s32.totalorder %s20, 1
      %p131 = por %p129, %p130
      %p132 = scmp.ne.s32.totalorder %s124, %s127
      %p133 = scmp.eq.s32.totalorder %s20, 0
      %p134 = por %p132, %p133
      %p135 = scmp.ne.s32.totalorder %s124, %s127
      %p136 = scmp.eq.s32.totalorder %s25, 1
      %p137 = por %p135, %p136
      %p138 = scmp.ne.s32.totalorder %s127, %s128
      %p139 = scmp.eq.s32.totalorder %s25, 0
      %p140 = por %p138, %p139
      %p141 = scmp.ne.s32.totalorder %s127, %s128
      %p142 = scmp.eq.s32.totalorder %s26, 1
      %p143 = por %p141, %p142
      %p145 = scmp.ne.s32.totalorder %s128, %s144
      %p146 = scmp.eq.s32.totalorder %s26, 0
      %p147 = por %p145, %p146
      %s148 = ssub.s32 %s20, %s27
      %p149 = scmp.eq.s32.totalorder %s148, 0
      %s151 = sadd.s32 %s150, 1
      %s152 = scalar_select %p149, %s150, %s151
      %p155 = pneg %p149
      %p156 = scmp.eq.s32.totalorder %s20, 1
      %p157 = por %p155, %p156
      %p158 = scmp.ne.s32.totalorder %s150, %s153
      %p159 = scmp.eq.s32.totalorder %s20, 0
      %p160 = por %p158, %p159
      %p161 = scmp.ne.s32.totalorder %s150, %s153
      %p162 = scmp.eq.s32.totalorder %s25, 1
      %p163 = por %p161, %p162
      %p164 = scmp.ne.s32.totalorder %s153, %s154
      %p165 = scmp.eq.s32.totalorder %s25, 0
      %p166 = por %p164, %p165
      %p167 = scmp.ne.s32.totalorder %s153, %s154
      %p168 = scmp.eq.s32.totalorder %s26, 1
      %p169 = por %p167, %p168
      %p171 = scmp.ne.s32.totalorder %s154, %s170
      %p172 = scmp.eq.s32.totalorder %s26, 0
      %p173 = por %p171, %p172
      %p174 = scmp.le.s32.totalorder 1, %s20
      %p175 = scmp.lt.s32.totalorder %s20, 3
      %p176 = pnand %p174, %p175
      %p177 = pneg %p176
      // Predicated region
      $region9: #{tpu_custom_call.1} parent=5 // pred_check
        _
      $region10: #{tpu_custom_call.1} parent=5 // pred_check_branch
        %179 = sbr.rel (%p176) target = $region12
      $region11: #{tpu_custom_call.1} parent=5 // pred_region
        %s180 = ssub.s32 %s20, 1
        // Predicated region
        $region13: #{tpu_custom_call.1} parent=11 // pred_check
          %p181 = pneg %p67
        $region14: #{tpu_custom_call.1} parent=11 // pred_check_branch
          %183 = sbr.rel (%p181) target = $region16
        $region15: #{tpu_custom_call.1} parent=11 // pred_region
          _
        $region16: #{tpu_custom_call.1} parent=11 // pred_fallthru
          _
        // Predicated region
        $region17: #{tpu_custom_call.1} parent=11 // pred_check
          %p184 = pneg %p88
        $region18: #{tpu_custom_call.1} parent=11 // pred_check_branch
          %186 = sbr.rel (%p184) target = $region20
        $region19: #{tpu_custom_call.1} parent=11 // pred_region
          _
        $region20: #{tpu_custom_call.1} parent=11 // pred_fallthru
          _
      $region12: #{tpu_custom_call.1} parent=5 // pred_fallthru
        _
      %p187 = scmp.lt.s32.totalorder %s20, 2
      // Predicated region
      $region21: #{tpu_custom_call.1} parent=5 // pred_check
        %p188 = pneg %p187
      $region22: #{tpu_custom_call.1} parent=5 // pred_check_branch
        %190 = sbr.rel (%p188) target = $region24
      $region23: #{tpu_custom_call.1} parent=5 // pred_region
        // Predicated region
        $region25: #{tpu_custom_call.1} parent=23 // pred_check
          %p191 = pneg %p40
        $region26: #{tpu_custom_call.1} parent=23 // pred_check_branch
          %193 = sbr.rel (%p191) target = $region28
        $region27: #{tpu_custom_call.1} parent=23 // pred_region
          %s194 = sand.u32 %s30, 1
          %s195 = scalar_lea.sflag [#allocation4], %s194
          %s196 = sand.u32 %s30, 1
          %s197 = smul.addr %s196, 8
          %s198 = scalar_lea.vmem [#allocation3], %s197
          %200 = vsyncadd %s195, 0
          %s201 = smul.addr %s20, 8
          %s202 = scalar_lea.hbm %s0, %s201
          %s204 = sshll.u32 %s202, 4
          %s205 = int_to_ptr.hbm [resolvable:$true] %s204
          %s206 = sshll.u32 %s198, 4
          %s207 = int_to_ptr.vmem [resolvable:$true] %s206
          %209 = dma.hbm_to_vmem [thread:$0]  %s205, 128, %s207, %s195
        $region28: #{tpu_custom_call.1} parent=23 // pred_fallthru
          _
        // Predicated region
        $region29: #{tpu_custom_call.1} parent=23 // pred_check
          %p210 = pneg %p108
        $region30: #{tpu_custom_call.1} parent=23 // pred_check_branch
          %212 = sbr.rel (%p210) target = $region32
        $region31: #{tpu_custom_call.1} parent=23 // pred_region
          %p213 = scmp.lt.s32.totalorder %s20, 1
          %s214 = scalar_select %p213, %s20, 1
          %s215 = scalar_lea.vmem %s3, %s214
        $region32: #{tpu_custom_call.1} parent=23 // pred_fallthru
          _
      $region24: #{tpu_custom_call.1} parent=5 // pred_fallthru
        _
      %p216 = scmp.le.s32.totalorder 1, %s20
      %p217 = scmp.lt.s32.totalorder %s20, 3
      %p218 = pnand %p216, %p217
      %p219 = pneg %p218
      // Predicated region
      $region33: #{tpu_custom_call.1} parent=5 // pred_check
        _
      $region34: #{tpu_custom_call.1} parent=5 // pred_check_branch
        %221 = sbr.rel (%p218) target = $region36
      $region35: #{tpu_custom_call.1} parent=5 // pred_region
        %s222 = ssub.s32 %s20, 1
        %s223 = sand.u32 %s33, 1
        %s224 = scalar_lea.sflag [#allocation4], %s223
        %s225 = sand.u32 %s33, 1
        %s226 = smul.addr %s225, 8
        %s227 = scalar_lea.vmem [#allocation3], %s226
        // Predicated region
        $region37: #{tpu_custom_call.1} parent=35 // pred_check
          %p228 = pneg %p46
        $region38: #{tpu_custom_call.1} parent=35 // pred_check_branch
          %230 = sbr.rel (%p228) target = $region40
        $region39: #{tpu_custom_call.1} parent=35 // pred_region
          %232 = dma.done %s224, 128
        $region40: #{tpu_custom_call.1} parent=35 // pred_fallthru
          _
        %s233 = sand.u32 %s33, 1
        %s234 = scalar_lea.sflag [#allocation4], %s233
        %s235 = sand.u32 %s33, 1
        %s236 = smul.addr %s235, 8
        %s237 = scalar_lea.vmem [#allocation3], %s236
        %p238 = pneg %p46
        %p239 = pneg %p43
        %p240 = pneg %p67
        %p241 = pneg %p64
        %p242 = pneg %p88
        %p243 = pneg %p85
        %p244 = scmp.lt.s32.totalorder %s25, 1
        %s245 = scalar_select %p244, %s25, 1
        %s246 = scalar_lea.vmem %s3, %s245
        %p247 = pneg %p114
        %p248 = pneg %p111
        %p249 = pneg %p140
        %p250 = pneg %p137
        %s251 = sand.u32 %s127, 1
        %s252 = scalar_lea.sflag [#allocation5], %s251
        %s253 = sand.u32 %s127, 1
        %s254 = scalar_lea.vmem [#allocation6], %s253
        %p255 = pneg %p166
        %p256 = pneg %p163
        %p257 = scmp.lt.s32.totalorder %s25, 1
        %s258 = scalar_select %p257, %s25, 1
        %s259 = smul.addr %s258, 8
        %s260 = scalar_lea.vmem %s5, %s259
        %p261 = scmp.lt.s32.totalorder %s25, 1
        %s262 = scalar_select %p261, %s25, 1
        %s263 = scalar_lea.vmem %s3, %s262
        %p264 = scmp.lt.s32.totalorder %s25, 1
        %s265 = scalar_select %p264, %s25, 1
        %s266 = smul.addr %s265, 8
        %s267 = scalar_lea.vmem %s5, %s266
        %v268 = vld [vmem:[%s227] sm:$0xff]
        %v269 = vld [vmem:[%s1] sm:$0x1]
        %v270 = vld [vmem:[#allocation2] sm:$0x1]
        %v271 = vld [vmem:[%s263] sm:$0x1]
        %v273 = vperm.slane %v269, 0
        %v275 = vmul.f32 %v268, %v273
        %vm276 = vcmask 261120
        %v277 = vsel %vm276, %v275, 0.0
        %278 = vadd.xlane.f32.xlu0 %v277
        %v279 = vpop.xlane.xlu0 %278
        %v281 = vperm.slane %v270, 0
        %v283 = vadd.f32 %v279, %v281
        %vm284 = vcmask 7168
        %v285 = vsel %vm284, %v283, -inf
        %v286 = vrot.slane %v285, 4
        %v287 = vmax.f32 %v285, %v286
        %v288 = vrot.slane %v287, 2
        %v289 = vmax.f32 %v287, %v288
        %v290 = vrot.slane %v289, 1
        %v291 = vmax.f32 %v289, %v290
        %v292 = vsub.f32 %v283, %v291
        %v293 = vmul.f32 %v292, 1.442695
        %v294 = vpow.pop %v293
        %v295 = vsel %vm284, %v294, 0.0
        %v296 = vrot.slane %v295, 4
        %v297 = vadd.f32 %v295, %v296
        %v298 = vrot.slane %v297, 2
        %v299 = vadd.f32 %v297, %v298
        %v300 = vrot.slane %v299, 1
        %v301 = vadd.f32 %v299, %v300
        %v302 = vlaneseq
        %v303 = vshrl.u32 %v302, 7
        %v304 = vlaneseq
        %v305 = vand.u32 %v304, 127
        %vm306 = vcmp.le.s32.totalorder %v303, %v305
        %308 = vset.pattern.permute.xlu0 0
        %309 = vperm.xlu0 %308, %v294
        %v310 = vpop.permute.xlu0 %309
        %v312 = vsel %vm306, %v310, 0.0
        %vm313 = vcmask 64512
        %v314 = vsel %vm313, %v312, 0.0
        %v315 = vrot.slane %v314, 4
        %v316 = vadd.f32 %v314, %v315
        %v317 = vrot.slane %v316, 2
        %v318 = vadd.f32 %v316, %v317
        %v319 = vrot.slane %v318, 1
        %v320 = vadd.f32 %v318, %v319
        %v321 = vmul.f32 %v271, %v301
        %323 = vset.pattern.permute.xlu0 0
        %324 = vperm.xlu0 %323, %v321
        %v325 = vpop.permute.xlu0 %324
        %v327 = vperm.slane %v325, 0
        %vm328 = vcmp.le.f32.partialorder %v320, %v327
        %v329 = vsel %vm328, 1, 0
        %v330 = vsel %vm313, %v329, 0
        %v331 = vand.u32 %v330, 65535
        %v332 = vshrl.u32 %v330, 16
        %v333 = vcvt.s32.f32 %v331
        %v334 = vcvt.s32.f32 %v332
        %335 = vadd.xlane.f32.xlu0 %v333
        %v336 = vpop.xlane.xlu0 %335
        %337 = vadd.xlane.f32.xlu0 %v334
        %v338 = vpop.xlane.xlu0 %337
        %v339 = vcvt.f32.s32 %v336
        %v340 = vcvt.f32.s32 %v338
        %v341 = vshll.u32 %v340, 16
        %v342 = vadd.s32 %v341, %v339
        %s343 = vtos %v342
        %v344 = vstv %s343
        %vm345 = vcmp.lt.s32.totalorder %v344, 7
        %v346 = vsel %vm345, %v344, 7
        %vm347 = vcmp.eq.s32.totalorder %v303, %v346
        %v348 = vsel %vm347, %v283, 0.0
        %v349 = vsel %vm284, %v348, 0.0
        %350 = vadd.xlane.f32.xlu0 %v349
        %v351 = vpop.xlane.xlu0 %350
        %v352 = vrot.slane %v351, 4
        %v353 = vadd.f32 %v351, %v352
        %v354 = vrot.slane %v353, 2
        %v355 = vadd.f32 %v353, %v354
        %v356 = vrot.slane %v355, 1
        %v357 = vadd.f32 %v355, %v356
        %s358 = vtos %v357
        %v359 = vstv %s358
        %v360 = vsub.f32 %v359, %v291
        %v361 = vlog2.pop %v301
        %v362 = vmul.f32 %v361, 0.6931472
        %v363 = vsub.f32 %v360, %v362
        %vm364 = vcmp.eq.s32.totalorder %v305, 0
        %v365 = vcvt.s32.f32 %v346
        %367 = vset.pattern.permute.xlu0 0
        %368 = vperm.xlu0 %367, %v363
        %v369 = vpop.permute.xlu0 %368
        %v371 = vsel %vm364, %v365, %v369
        %vm372 = vcmask 8192
        %373 = vst.msk [vmem:[%s254] sm:$0x1] %vm372, %v371
        %vm374 = vcmp.lt.s32.totalorder %v303, %v346
        %v375 = vsel %vm374, 1, 0
        %vm376 = vcmp.eq.s32.totalorder %v375, 1
        %v378 = vrot.slane %v268, 1
        %v380 = vsel %vm376, %v268, %v378
        %vm381 = vcmask 260096
        %382 = vst.msk [vmem:[%s267] sm:$0x7f] %vm381, %v380
        %s383 = sand.u32 %s127, 1
        %s384 = scalar_lea.sflag [#allocation5], %s383
        %s385 = sand.u32 %s127, 1
        %s386 = scalar_lea.vmem [#allocation6], %s385
        %p387 = scmp.lt.s32.totalorder %s25, 1
        %s388 = scalar_select %p387, %s25, 1
        %s389 = smul.addr %s388, 8
        %s390 = scalar_lea.vmem %s5, %s389
        // Predicated region
        $region41: #{tpu_custom_call.1} parent=35 // pred_check
          %p391 = pneg %p137
        $region42: #{tpu_custom_call.1} parent=35 // pred_check_branch
          %393 = sbr.rel (%p391) target = $region44
        $region43: #{tpu_custom_call.1} parent=35 // pred_region
          %395 = vsyncadd %s384, 0
          %s396 = scalar_lea.hbm %s4, %s25
          %s398 = sshll.u32 %s386, 4
          %s399 = int_to_ptr.vmem [resolvable:$true] %s398
          %s400 = sshll.u32 %s396, 4
          %s401 = int_to_ptr.hbm [resolvable:$true] %s400
          %403 = dma.vmem_to_hbm [thread:$0]  %s399, 16, %s401, %s384
        $region44: #{tpu_custom_call.1} parent=35 // pred_fallthru
          _
        // Predicated region
        $region45: #{tpu_custom_call.1} parent=35 // pred_check
          %p404 = pneg %p163
        $region46: #{tpu_custom_call.1} parent=35 // pred_check_branch
          %406 = sbr.rel (%p404) target = $region48
        $region47: #{tpu_custom_call.1} parent=35 // pred_region
          _
        $region48: #{tpu_custom_call.1} parent=35 // pred_fallthru
          _
      $region36: #{tpu_custom_call.1} parent=5 // pred_fallthru
        _
      %p407 = scmp.le.s32.totalorder 2, %s20
      // Predicated region
      $region49: #{tpu_custom_call.1} parent=5 // pred_check
        %p408 = pneg %p407
      $region50: #{tpu_custom_call.1} parent=5 // pred_check_branch
        %410 = sbr.rel (%p408) target = $region52
      $region51: #{tpu_custom_call.1} parent=5 // pred_region
        %s411 = ssub.s32 %s20, 2
        // Predicated region
        $region53: #{tpu_custom_call.1} parent=51 // pred_check
          %p412 = pneg %p143
        $region54: #{tpu_custom_call.1} parent=51 // pred_check_branch
          %414 = sbr.rel (%p412) target = $region56
        $region55: #{tpu_custom_call.1} parent=51 // pred_region
          %s415 = sand.u32 %s128, 1
          %s416 = scalar_lea.sflag [#allocation5], %s415
          %s417 = sand.u32 %s128, 1
          %s418 = scalar_lea.vmem [#allocation6], %s417
          %420 = dma.done %s416, 16
        $region56: #{tpu_custom_call.1} parent=51 // pred_fallthru
          _
        // Predicated region
        $region57: #{tpu_custom_call.1} parent=51 // pred_check
          %p421 = pneg %p169
        $region58: #{tpu_custom_call.1} parent=51 // pred_check_branch
          %423 = sbr.rel (%p421) target = $region60
        $region59: #{tpu_custom_call.1} parent=51 // pred_region
          %p424 = scmp.lt.s32.totalorder %s26, 1
          %s425 = scalar_select %p424, %s26, 1
          %s426 = smul.addr %s425, 8
          %s427 = scalar_lea.vmem %s5, %s426
        $region60: #{tpu_custom_call.1} parent=51 // pred_fallthru
          _
      $region52: #{tpu_custom_call.1} parent=5 // pred_fallthru
        _
    $region6: #{tpu_custom_call.1} parent=1 // loop_footer
      %s24 = sadd.s32 1, %s20
    $region7: #{tpu_custom_call.1} parent=1 // loop_footer_branch
      %19 = sbr.rel target = $region3
    $region8: #{tpu_custom_call.1} parent=1 // loop_exit
      _
    %428 = vsyncpa [#allocation4], 1
    %s429 = scalar_lea.sflag [#allocation4], 1
    %430 = vsyncpa %s429, 1
    %431 = vsyncpa [#allocation5], 1
    %s432 = scalar_lea.sflag [#allocation5], 1
    %433 = vsyncpa %s432, 1

</llo_original>
